<compile_context>
chip_gen: v7x
topology: tpu7x:2x2x1
jax: 0.10.0
libtpu: 0.0.40
codegen_flags: <defaults>
</compile_context>

<pallas_src>
import functools

import jax
import jax.numpy as jnp
from jax.experimental import pallas as pl
from jax.experimental.pallas import tpu as pltpu


def _ce_kernel(x_ref, t_ref, out_ref, *, hw_valid, t_hw):
    # x_ref:   (1, C, t_hw)   logits tile (class on sublanes, pixels on lanes)
    # t_ref:   (1, 1, t_hw)   integer targets tile
    # out_ref: (1, 1, 1, 1)   per-(batch, pixel-tile) partial loss sum (f32)
    x = x_ref[0].astype(jnp.float32)            # (C, t_hw)
    t = t_ref[0].astype(jnp.int32)              # (1, t_hw)

    # numerically stable log-sum-exp over the class (sublane) axis
    m = jnp.max(x, axis=0, keepdims=True)       # (1, t_hw)
    xs = x - m                                  # (C, t_hw)
    sumexp = jnp.sum(jnp.exp(xs), axis=0, keepdims=True)   # (1, t_hw)

    # target-class logit via a (C, 1) class iota broadcast against t
    # (no full (C, t_hw) iota); reuse xs so loss = log(sumexp) - (x[t] - m)
    cls = jax.lax.broadcasted_iota(jnp.int32, (x.shape[0], 1), 0)   # (C, 1)
    tgt_shift = jnp.sum(jnp.where(cls == t, xs, 0.0), axis=0, keepdims=True)

    loss = jnp.log(sumexp) - tgt_shift          # (1, t_hw)

    if hw_valid % t_hw != 0:
        # Partial final tile: zero lanes beyond the true H*W extent BEFORE the
        # cross-lane reduce (padded lanes may hold garbage -> NaN/Inf loss;
        # nothing before this point mixes data across lanes).
        j = pl.program_id(1)
        pix = j * t_hw + jax.lax.broadcasted_iota(jnp.int32, loss.shape, 1)
        loss = jnp.where(pix < hw_valid, loss, 0.0)

    # single cross-lane reduce per tile (XLU has slack in this kernel)
    out_ref[...] = jnp.sum(loss).reshape(1, 1, 1, 1)


def _vmem_capacity_bytes():
    try:
        return int(pltpu.get_tpu_info().vmem_capacity_bytes)
    except Exception:
        return 64 << 20   # conservative fallback: v7x per-TensorCore VMEM


def _pad(v, mult):
    return ((v + mult - 1) // mult) * mult


def cross_entropy_loss(logits_nchw, targets_nhw):
    """Equivalent of nn.CrossEntropyLoss()(logits_nchw, targets_nhw)
    (PyTorch defaults: 'mean' reduction, no weights, no ignore_index).

    NOTE: out-of-range targets (< 0 or >= C) silently contribute loss = lse
    (target logit treated as 0) instead of erroring, consistent with the
    stated no-ignore_index scope."""
    N, C, H, W = logits_nchw.shape
    HW = H * W
    itemsize = jnp.dtype(logits_nchw.dtype).itemsize

    # NCHW -> (N, C, H*W): reshape only (free for contiguous), no transpose.
    x = logits_nchw.reshape(N, C, HW)
    t = targets_nhw.reshape(N, 1, HW)
    if jnp.dtype(t.dtype).itemsize > 4:
        t = t.astype(jnp.int32)   # int64 -> int32; narrower int dtypes pass through

    # ---- generation-aware VMEM budgeting (padded footprints, x2 buffers) ----
    vmem_cap = _vmem_capacity_bytes()
    vmem_limit = min((vmem_cap * 3) // 4, 96 << 20)   # ~48 MiB v7x, ~96 MiB v5e/v6e
    block_target = (16 << 20) if vmem_cap >= (100 << 20) else (10 << 20)
    budget = vmem_limit - (4 << 20)                   # headroom: outputs / compiler scratch

    sub_in = 8 * max(1, 4 // itemsize)    # sublane multiple: f32=8, bf16=16, int8=32
    c_pad_in = _pad(C, sub_in)            # padded class extent of the logits block
    c_pad_f32 = _pad(C, 8)                # padded class extent of f32 temps

    # Bytes per lane column:
    #   2x double-buffered logits block + 2x double-buffered targets block
    #   (any int width pads to 32 B/lane) + ~2x f32 in-kernel temps
    #   (upcast copy + exp intermediates).
    per_lane = 2 * (c_pad_in * itemsize + 32) + 2 * c_pad_f32 * 4

    hw_pad = _pad(HW, 128)
    lanes_by_block = (block_target // (c_pad_in * itemsize)) // 128 * 128
    lanes_by_vmem = (budget // per_lane) // 128 * 128
    t_hw = min(hw_pad, lanes_by_block, lanes_by_vmem)
    if t_hw < 128:
        # TODO(synk): class-tiled path (extra grid axis over C with flash-style
        # online log-sum-exp carried in small VMEM scratch) for very large C.
        raise NotImplementedError(
            f"num_classes={C} too large to fit a 128-lane pixel tile in VMEM "
            f"(budget={budget} bytes); class-tiled path not implemented.")
    num_j = pl.cdiv(HW, t_hw)

    kernel = functools.partial(_ce_kernel, hw_valid=HW, t_hw=t_hw)

    partials = pl.pallas_call(
        kernel,
        out_shape=jax.ShapeDtypeStruct((N, num_j, 1, 1), jnp.float32),
        grid_spec=pltpu.PrefetchScalarGridSpec(
            num_scalar_prefetch=0,
            grid=(N, num_j),
            in_specs=[
                pl.BlockSpec((1, C, t_hw), lambda n, j: (n, 0, j)),
                pl.BlockSpec((1, 1, t_hw), lambda n, j: (n, 0, j)),
            ],
            out_specs=pl.BlockSpec((1, 1, 1, 1), lambda n, j: (n, j, 0, 0)),
        ),
        compiler_params=pltpu.CompilerParams(
            # no cross-step carry anymore -> both axes parallel (v7x megacore
            # can shard the pixel-tile axis even when N is small / odd)
            dimension_semantics=("parallel", "parallel"),
            vmem_limit_bytes=int(vmem_limit),
        ),
    )(x, t)

    # 'mean' reduction over all N*H*W elements (PyTorch default); f32 partials
    # summed in the wrapper.
    return jnp.sum(partials) / jnp.float32(N * HW)


if __name__ == "__main__":
    key = jax.random.PRNGKey(0)
    k1, k2 = jax.random.split(key)

    N, C, H, W = 2, 4, 16, 16
    logits = jax.random.normal(k1, (N, C, H, W), dtype=jnp.float32)
    targets = jax.random.randint(k2, (N, H, W), 0, C, dtype=jnp.int32)

    loss = cross_entropy_loss(logits, targets)
    loss = jax.block_until_ready(loss)

    # pure-JAX reference (same math, no Pallas)
    x_ref = jnp.transpose(logits, (0, 2, 3, 1)).reshape(-1, C)
    t_ref = targets.reshape(-1)
    logp = jax.nn.log_softmax(x_ref, axis=-1)
    ref = -jnp.mean(jnp.take_along_axis(logp, t_ref[:, None], axis=-1))
    assert jnp.allclose(loss, ref, rtol=1e-5, atol=1e-5), (loss, ref)

    print("KERNEL_OK")
</pallas_src>

<mosaic_0001>
module attributes {stable_mosaic.version = 11 : i64} {
  func.func @_ce_kernel(%arg0: i32, %arg1: i32, %arg2: memref<1x4x256xf32, #tpu.memory_space<vmem>>, %arg3: memref<1x1x256xi32, #tpu.memory_space<vmem>>, %arg4: memref<1x1x1x1xf32, #tpu.memory_space<vmem>>) attributes {dimension_semantics = [#tpu.dimension_semantics<parallel>, #tpu.dimension_semantics<parallel>], iteration_bounds = array<i64: 2, 1>, scalar_prefetch = 0 : i64, scratch_operands = 0 : i64, tpu.core_type = #tpu.core_type<tc>, window_params = [{transform_indices = @transform_0, window_bounds = array<i64: 1, 4, 256>}, {transform_indices = @transform_1, window_bounds = array<i64: 1, 1, 256>}, {transform_indices = @transform_2, window_bounds = array<i64: 1, 1, 1, 1>}]} {
    %c0 = arith.constant 0 : index
    %c0_0 = arith.constant 0 : index
    %c0_1 = arith.constant 0 : index
    %0 = vector.load %arg2[%c0, %c0_0, %c0_1] : memref<1x4x256xf32, #tpu.memory_space<vmem>>, vector<1x4x256xf32>
    %1 = vector.shape_cast %0 : vector<1x4x256xf32> to vector<4x256xf32>
    %c0_2 = arith.constant 0 : index
    %c0_3 = arith.constant 0 : index
    %c0_4 = arith.constant 0 : index
    %2 = vector.load %arg3[%c0_2, %c0_3, %c0_4] : memref<1x1x256xi32, #tpu.memory_space<vmem>>, vector<1x1x256xi32>
    %3 = vector.shape_cast %2 : vector<1x1x256xi32> to vector<1x256xi32>
    %cst = arith.constant dense<0xFF800000> : vector<256xf32>
    %4 = vector.multi_reduction <maximumf>, %1, %cst [0] : vector<4x256xf32> to vector<256xf32>
    %5 = vector.shape_cast %4 : vector<256xf32> to vector<1x256xf32>
    %6 = vector.broadcast %5 : vector<1x256xf32> to vector<4x256xf32>
    %7 = arith.subf %1, %6 : vector<4x256xf32>
    %8 = math.exp %7 : vector<4x256xf32>
    %cst_5 = arith.constant dense<0.000000e+00> : vector<256xf32>
    %9 = vector.multi_reduction <add>, %8, %cst_5 [0] : vector<4x256xf32> to vector<256xf32>
    %10 = vector.shape_cast %9 : vector<256xf32> to vector<1x256xf32>
    %11 = tpu.iota {dimensions = array<i32: 0>} : vector<4x1xi32>
    %12 = vector.broadcast %11 : vector<4x1xi32> to vector<4x256xi32>
    %13 = vector.broadcast %3 : vector<1x256xi32> to vector<4x256xi32>
    %14 = arith.cmpi eq, %12, %13 : vector<4x256xi32>
    %cst_6 = arith.constant 0.000000e+00 : f32
    %15 = vector.broadcast %cst_6 : f32 to vector<4x256xf32>
    %16 = arith.select %14, %7, %15 : vector<4x256xi1>, vector<4x256xf32>
    %cst_7 = arith.constant dense<0.000000e+00> : vector<256xf32>
    %17 = vector.multi_reduction <add>, %16, %cst_7 [0] : vector<4x256xf32> to vector<256xf32>
    %18 = vector.shape_cast %17 : vector<256xf32> to vector<1x256xf32>
    %19 = math.log %10 : vector<1x256xf32>
    %20 = arith.subf %19, %18 : vector<1x256xf32>
    %21 = vector.shape_cast %20 : vector<1x256xf32> to vector<1x1x256xf32>
    %cst_8 = arith.constant dense<0.000000e+00> : vector<1xf32>
    %22 = vector.multi_reduction <add>, %21, %cst_8 [1, 2] : vector<1x1x256xf32> to vector<1xf32>
    %23 = vector.shape_cast %22 : vector<1xf32> to vector<1x1x1xf32>
    %24 = vector.extract %23[0, 0, 0] : f32 from vector<1x1x1xf32>
    %25 = vector.broadcast %24 : f32 to vector<1x1x1x1xf32>
    %c0_9 = arith.constant 0 : index
    %c0_10 = arith.constant 0 : index
    %c0_11 = arith.constant 0 : index
    %c0_12 = arith.constant 0 : index
    %26 = vector.load %arg4[%c0_9, %c0_10, %c0_11, %c0_12] : memref<1x1x1x1xf32, #tpu.memory_space<vmem>>, vector<1x1x1x1xf32>
    tpu.vector_store %arg4[%c0_9, %c0_10, %c0_11, %c0_12], %25 {strides = array<i32>} : memref<1x1x1x1xf32, #tpu.memory_space<vmem>>, vector<1x1x1x1xf32>,
    return
  }
  func.func @transform_0(%arg0: i32, %arg1: i32) -> (i32, i32, i32) {
    %c0_i32 = arith.constant 0 : i32
    %c0_i32_0 = arith.constant 0 : i32
    return %arg0, %c0_i32, %arg1 : i32, i32, i32
  }
  func.func @transform_1(%arg0: i32, %arg1: i32) -> (i32, i32, i32) {
    %c0_i32 = arith.constant 0 : i32
    %c0_i32_0 = arith.constant 0 : i32
    return %arg0, %c0_i32, %arg1 : i32, i32, i32
  }
  func.func @transform_2(%arg0: i32, %arg1: i32) -> (i32, i32, i32, i32) {
    %c0_i32 = arith.constant 0 : i32
    %c0_i32_0 = arith.constant 0 : i32
    %c0_i32_1 = arith.constant 0 : i32
    return %arg0, %arg1, %c0_i32, %c0_i32_0 : i32, i32, i32, i32
  }
}

</mosaic_0001>

<llo_original>
// kernel: tpu_custom_call.1
$region0: #{tpu_custom_call.1}
  #allocation0 [shape = 'u32[]', space=smem, size = 0x4, offset = 0x4, fixed_abs, tag = 'smem constant byte address 0x4 - core index']
  #allocation1 [shape = 'u32[144,128]{1,0:T(1,128)}', space=vmem, size = 0x12000, scoped, tag = 'internal scratch']
  %s0 = inlined_call_operand.hbm [shape: f32[2,4,256], index: 0, kind: input, shape index: {}]
  %s1 = inlined_call_operand.hbm [shape: s32[2,1,256], index: 1, kind: input, shape index: {}]
  %s2 = inlined_call_operand.vmem [shape: f32[2,1,1,1], index: 2, kind: output, shape index: {}]
  %s3 = sld [smem:[#allocation0]]
  $region49: #{tpu_custom_call.1} parent=0
    _
  %s5 = ssub.s32 1, %s3
  %s6 = scalar_select 0, %s5, %s3
  $region1: #{tpu_custom_call.1} parent=0
    #allocation2 [shape = 'u8[8192]{0}', space=vmem, size = 0x2000, scoped, tag = 'input window, operand 0']
    #allocation3 [shape = 's32[2]{0}', space=sflag, size = 0x8, scoped, tag = 'scoped memory for tpu_custom_call.1']
    #allocation4 [shape = 'u8[2048]{0}', space=vmem, size = 0x800, scoped, tag = 'input window, operand 1']
    #allocation5 [shape = 's32[2]{0}', space=sflag, size = 0x8, scoped, tag = 'scoped memory for tpu_custom_call.1']
    %7 = vsyncpa [#allocation3], 0
    %s8 = scalar_lea.sflag [#allocation3], 1
    %9 = vsyncpa %s8, 0
    %10 = vsyncpa [#allocation5], 0
    %s11 = scalar_lea.sflag [#allocation5], 1
    %12 = vsyncpa %s11, 0
    loop: start=0, step=1, limit=4
    $region2: #{tpu_custom_call.1} parent=1 // loop_pre_header
      _
    $region3: #{tpu_custom_call.1} parent=1 // loop_header
      %s14 = sphi 0, %s18
      %p15 = scmp.ge.s32.totalorder %s14, 4
      %s21 = sphi 0, %s33
      %s22 = sphi 0, %s29
      %s23 = sphi 0, %s21
      %s24 = sphi 0, %s22
      %s25 = sphi 0, %s23
      %s26 = sphi 0, %s24
      %s38 = sphi 0, %s40
      %s41 = sphi 0, %s38
      %s42 = sphi 0, %s41
      %s58 = sphi 0, %s42
      %s66 = sphi 0, %s68
      %s69 = sphi 0, %s66
      %s70 = sphi 0, %s69
      %s86 = sphi 0, %s70
      %s94 = sphi 0, %s96
      %s97 = sphi 0, %s94
      %s98 = sphi 0, %s97
      %s114 = sphi 0, %s98
    $region4: #{tpu_custom_call.1} parent=1 // loop_header_branch
      %17 = sbr.rel (%p15) target = $region8
    $region5: #{tpu_custom_call.1} parent=1 // loop_body
      %s19 = ssub.s32 %s14, 1
      %s20 = ssub.s32 %s14, 2
      %s27 = sadd.s32 1, %s22
      %p28 = scmp.ge.s32.totalorder %s27, 1
      %s29 = scalar_select %p28, 0, %s27
      %s30 = sadd.s32 1, %s21
      %s31 = scalar_select %p28, %s30, %s21
      %p32 = scmp.ge.s32.totalorder %s31, 2
      %s33 = scalar_select %p32, 0, %s31
      %s34 = ssub.s32 %s21, %s33
      %s35 = ssub.s32 %s22, %s29
      %s36 = sor.u32 %s34, %s35
      %p37 = scmp.eq.s32.totalorder %s36, 0
      %s39 = sadd.s32 %s38, 1
      %s40 = scalar_select %p37, %s38, %s39
      %p43 = pneg %p37
      %p44 = scmp.eq.s32.totalorder %s14, 1
      %p45 = por %p43, %p44
      %p46 = scmp.ne.s32.totalorder %s38, %s41
      %p47 = scmp.eq.s32.totalorder %s14, 0
      %p48 = por %p46, %p47
      %p49 = scmp.ne.s32.totalorder %s38, %s41
      %p50 = scmp.eq.s32.totalorder %s19, 1
      %p51 = por %p49, %p50
      %p52 = scmp.ne.s32.totalorder %s41, %s42
      %p53 = scmp.eq.s32.totalorder %s19, 0
      %p54 = por %p52, %p53
      %p55 = scmp.ne.s32.totalorder %s41, %s42
      %p56 = scmp.eq.s32.totalorder %s20, 1
      %p57 = por %p55, %p56
      %p59 = scmp.ne.s32.totalorder %s42, %s58
      %p60 = scmp.eq.s32.totalorder %s20, 0
      %p61 = por %p59, %p60
      %s62 = ssub.s32 %s21, %s33
      %s63 = ssub.s32 %s22, %s29
      %s64 = sor.u32 %s62, %s63
      %p65 = scmp.eq.s32.totalorder %s64, 0
      %s67 = sadd.s32 %s66, 1
      %s68 = scalar_select %p65, %s66, %s67
      %p71 = pneg %p65
      %p72 = scmp.eq.s32.totalorder %s14, 1
      %p73 = por %p71, %p72
      %p74 = scmp.ne.s32.totalorder %s66, %s69
      %p75 = scmp.eq.s32.totalorder %s14, 0
      %p76 = por %p74, %p75
      %p77 = scmp.ne.s32.totalorder %s66, %s69
      %p78 = scmp.eq.s32.totalorder %s19, 1
      %p79 = por %p77, %p78
      %p80 = scmp.ne.s32.totalorder %s69, %s70
      %p81 = scmp.eq.s32.totalorder %s19, 0
      %p82 = por %p80, %p81
      %p83 = scmp.ne.s32.totalorder %s69, %s70
      %p84 = scmp.eq.s32.totalorder %s20, 1
      %p85 = por %p83, %p84
      %p87 = scmp.ne.s32.totalorder %s70, %s86
      %p88 = scmp.eq.s32.totalorder %s20, 0
      %p89 = por %p87, %p88
      %s90 = ssub.s32 %s21, %s33
      %s91 = ssub.s32 %s22, %s29
      %s92 = sor.u32 %s90, %s91
      %p93 = scmp.eq.s32.totalorder %s92, 0
      %s95 = sadd.s32 %s94, 1
      %s96 = scalar_select %p93, %s94, %s95
      %p99 = pneg %p93
      %p100 = scmp.eq.s32.totalorder %s14, 1
      %p101 = por %p99, %p100
      %p102 = scmp.ne.s32.totalorder %s94, %s97
      %p103 = scmp.eq.s32.totalorder %s14, 0
      %p104 = por %p102, %p103
      %p105 = scmp.ne.s32.totalorder %s94, %s97
      %p106 = scmp.eq.s32.totalorder %s19, 1
      %p107 = por %p105, %p106
      %p108 = scmp.ne.s32.totalorder %s97, %s98
      %p109 = scmp.eq.s32.totalorder %s19, 0
      %p110 = por %p108, %p109
      %p111 = scmp.ne.s32.totalorder %s97, %s98
      %p112 = scmp.eq.s32.totalorder %s20, 1
      %p113 = por %p111, %p112
      %p115 = scmp.ne.s32.totalorder %s98, %s114
      %p116 = scmp.eq.s32.totalorder %s20, 0
      %p117 = por %p115, %p116
      %p118 = scmp.le.s32.totalorder 1, %s14
      %p119 = scmp.lt.s32.totalorder %s14, 3
      %p120 = pnand %p118, %p119
      %p121 = pneg %p120
      // Predicated region
      $region9: #{tpu_custom_call.1} parent=5 // pred_check
        _
      $region10: #{tpu_custom_call.1} parent=5 // pred_check_branch
        %123 = sbr.rel (%p120) target = $region12
      $region11: #{tpu_custom_call.1} parent=5 // pred_region
        %s124 = ssub.s32 %s14, 1
      $region12: #{tpu_custom_call.1} parent=5 // pred_fallthru
        _
      %p125 = scmp.lt.s32.totalorder %s14, 2
      // Predicated region
      $region13: #{tpu_custom_call.1} parent=5 // pred_check
        %p126 = pneg %p125
      $region14: #{tpu_custom_call.1} parent=5 // pred_check_branch
        %128 = sbr.rel (%p126) target = $region16
      $region15: #{tpu_custom_call.1} parent=5 // pred_region
        // Predicated region
        $region17: #{tpu_custom_call.1} parent=15 // pred_check
          %p129 = pneg %p48
        $region18: #{tpu_custom_call.1} parent=15 // pred_check_branch
          %131 = sbr.rel (%p129) target = $region20
        $region19: #{tpu_custom_call.1} parent=15 // pred_region
          %s132 = sand.u32 %s38, 1
          %s133 = scalar_lea.sflag [#allocation3], %s132
          %s134 = sand.u32 %s38, 1
          %s135 = smul.addr %s134, 8
          %s136 = scalar_lea.vmem [#allocation2], %s135
          %s137 = smul.u32 2, %s22
          %s139 = ssub.s32 128, 128
          %140 = vsyncadd %s133, %s139
          %s141 = smul.addr %s21, 2
          %s142 = sadd.s32 %s137, %s141
          %s143 = smul.addr %s142, 64
          %s144 = scalar_lea.hbm %s0, %s143
          %s146 = sshll.u32 %s136, 4
          %s147 = int_to_ptr.vmem [resolvable:$true] %s146
          %149 = dma.hbm_to_vmem [thread:$0]  %s144, 128, %s147, %s133
        $region20: #{tpu_custom_call.1} parent=15 // pred_fallthru
          _
        // Predicated region
        $region21: #{tpu_custom_call.1} parent=15 // pred_check
          %p150 = pneg %p76
        $region22: #{tpu_custom_call.1} parent=15 // pred_check_branch
          %152 = sbr.rel (%p150) target = $region24
        $region23: #{tpu_custom_call.1} parent=15 // pred_region
          %s153 = sand.u32 %s66, 1
          %s154 = scalar_lea.sflag [#allocation5], %s153
          %s155 = sand.u32 %s66, 1
          %s156 = smul.addr %s155, 2
          %s157 = scalar_lea.vmem [#allocation4], %s156
          %s158 = smul.u32 2, %s22
          %s160 = ssub.s32 32, 32
          %161 = vsyncadd %s154, %s160
          %s162 = smul.addr %s21, 2
          %s163 = sadd.s32 %s158, %s162
          %s164 = smul.addr %s163, 16
          %s165 = scalar_lea.hbm %s1, %s164
          %s167 = sshll.u32 %s157, 4
          %s168 = int_to_ptr.vmem [resolvable:$true] %s167
          %170 = dma.hbm_to_vmem [thread:$0]  %s165, 32, %s168, %s154
        $region24: #{tpu_custom_call.1} parent=15 // pred_fallthru
          _
      $region16: #{tpu_custom_call.1} parent=5 // pred_fallthru
        _
      %p171 = scmp.le.s32.totalorder 1, %s14
      %p172 = scmp.lt.s32.totalorder %s14, 3
      %p173 = pnand %p171, %p172
      %p174 = pneg %p173
      // Predicated region
      $region25: #{tpu_custom_call.1} parent=5 // pred_check
        _
      $region26: #{tpu_custom_call.1} parent=5 // pred_check_branch
        %176 = sbr.rel (%p173) target = $region28
      $region27: #{tpu_custom_call.1} parent=5 // pred_region
        %s177 = ssub.s32 %s14, 1
        %s178 = sand.u32 %s41, 1
        %s179 = scalar_lea.sflag [#allocation3], %s178
        %s180 = sand.u32 %s41, 1
        %s181 = smul.addr %s180, 8
        %s182 = scalar_lea.vmem [#allocation2], %s181
        // Predicated region
        $region29: #{tpu_custom_call.1} parent=27 // pred_check
          %p183 = pneg %p54
        $region30: #{tpu_custom_call.1} parent=27 // pred_check_branch
          %185 = sbr.rel (%p183) target = $region32
        $region31: #{tpu_custom_call.1} parent=27 // pred_region
          %186 = dma.done %s179, 128
        $region32: #{tpu_custom_call.1} parent=27 // pred_fallthru
          _
        %s187 = sand.u32 %s69, 1
        %s188 = scalar_lea.sflag [#allocation5], %s187
        %s189 = sand.u32 %s69, 1
        %s190 = smul.addr %s189, 2
        %s191 = scalar_lea.vmem [#allocation4], %s190
        // Predicated region
        $region33: #{tpu_custom_call.1} parent=27 // pred_check
          %p192 = pneg %p82
        $region34: #{tpu_custom_call.1} parent=27 // pred_check_branch
          %194 = sbr.rel (%p192) target = $region36
        $region35: #{tpu_custom_call.1} parent=27 // pred_region
          %195 = dma.done %s188, 32
        $region36: #{tpu_custom_call.1} parent=27 // pred_fallthru
          _
        %s196 = sand.u32 %s41, 1
        %s197 = scalar_lea.sflag [#allocation3], %s196
        %s198 = sand.u32 %s41, 1
        %s199 = smul.addr %s198, 8
        %s200 = scalar_lea.vmem [#allocation2], %s199
        %p201 = pneg %p54
        %p202 = pneg %p51
        %s203 = sand.u32 %s69, 1
        %s204 = scalar_lea.sflag [#allocation5], %s203
        %s205 = sand.u32 %s69, 1
        %s206 = smul.addr %s205, 2
        %s207 = scalar_lea.vmem [#allocation4], %s206
        %p208 = pneg %p82
        %p209 = pneg %p79
        %p210 = pneg %p110
        %p211 = pneg %p107
        %p212 = scmp.lt.s32.totalorder %s23, 1
        %s213 = scalar_select %p212, %s23, 1
        %p214 = scmp.lt.s32.totalorder %s24, 0
        %s215 = scalar_select %p214, %s24, 0
        %s216 = sadd.s32 %s215, %s213
        %s217 = scalar_lea.vmem %s2, %s216
        %s218 = smul.u32 2, %s24
        %s219 = smul.u32 2, %s24
        %p220 = scmp.lt.s32.totalorder %s23, 1
        %s221 = scalar_select %p220, %s23, 1
        %p222 = scmp.lt.s32.totalorder %s24, 0
        %s223 = scalar_select %p222, %s24, 0
        %s224 = sadd.s32 %s223, %s221
        %s225 = scalar_lea.vmem %s2, %s224
        %v226 = vld [vmem:[%s182] sm:$0xff]
        %v227 = vld [vmem:[%s191] sm:$0x3]
        %v229 = vcombine.high %v226, %v226
        %vm231 = vcmask 1043456
        %v232 = vsel %vm231, %v226, -inf
        %v233 = vrot.slane %v232, 4
        %v234 = vmax.f32 %v232, %v233
        %v235 = vrot.slane %v234, 2
        %v236 = vmax.f32 %v234, %v235
        %v237 = vrot.slane %v236, 1
        %v238 = vmax.f32 %v236, %v237
        %v239 = vsel %vm231, %v229, -inf
        %v240 = vrot.slane %v239, 4
        %v241 = vmax.f32 %v239, %v240
        %v242 = vrot.slane %v241, 2
        %v243 = vmax.f32 %v241, %v242
        %v244 = vrot.slane %v243, 1
        %v245 = vmax.f32 %v243, %v244
        %v248 = vcombine.low %v238, %v245
        %v250 = vsub.f32 %v226, %v248
        %v251 = vmul.f32 %v250, 1.442695
        %v252 = vpow.pop %v251
        %v254 = vcombine.high %v252, %v252
        %v256 = vsel %vm231, %v252, 0.0
        %v257 = vrot.slane %v256, 4
        %v258 = vadd.f32 %v256, %v257
        %v259 = vrot.slane %v258, 2
        %v260 = vadd.f32 %v258, %v259
        %v261 = vrot.slane %v260, 1
        %v262 = vadd.f32 %v260, %v261
        %v263 = vsel %vm231, %v254, 0.0
        %v264 = vrot.slane %v263, 4
        %v265 = vadd.f32 %v263, %v264
        %v266 = vrot.slane %v265, 2
        %v267 = vadd.f32 %v265, %v266
        %v268 = vrot.slane %v267, 1
        %v269 = vadd.f32 %v267, %v268
        %v270 = vlaneseq
        %v271 = vshrl.u32 %v270, 7
        %v272 = vlaneseq
        %v273 = vshrl.u32 %v272, 7
        %v274 = vsub.s32 0, %v273
        %v275 = vrot.slane %v227, %v274
        %v276 = vlaneseq
        %v277 = vshrl.u32 %v276, 7
        %v278 = vsub.s32 1, %v277
        %v279 = vrot.slane %v227, %v278
        %vm280 = vcmp.eq.s32.totalorder %v271, %v275
        %vm281 = vcmp.eq.s32.totalorder %v271, %v279
        %v283 = vcombine.high %v250, %v250
        %v285 = vsel %vm280, %v250, 0.0
        %v286 = vsel %vm281, %v283, 0.0
        %v287 = vsel %vm231, %v285, 0.0
        %v288 = vrot.slane %v287, 4
        %v289 = vadd.f32 %v287, %v288
        %v290 = vrot.slane %v289, 2
        %v291 = vadd.f32 %v289, %v290
        %v292 = vrot.slane %v291, 1
        %v293 = vadd.f32 %v291, %v292
        %v294 = vsel %vm231, %v286, 0.0
        %v295 = vrot.slane %v294, 4
        %v296 = vadd.f32 %v294, %v295
        %v297 = vrot.slane %v296, 2
        %v298 = vadd.f32 %v296, %v297
        %v299 = vrot.slane %v298, 1
        %v300 = vadd.f32 %v298, %v299
        %v301 = vlog2.pop %v262
        %v302 = vmul.f32 %v301, 0.6931472
        %v303 = vlog2.pop %v269
        %v304 = vmul.f32 %v303, 0.6931472
        %v305 = vsub.f32 %v302, %v293
        %v306 = vsub.f32 %v304, %v300
        %vm307 = vcmask 1040384
        %v308 = vsel %vm307, %v305, 0.0
        %v309 = vsel %vm307, %v306, 0.0
        %v310 = vadd.f32 %v308, %v309
        %311 = vadd.xlane.f32.xlu0 %v310
        %v312 = vpop.xlane.xlu0 %311
        %v313 = vrot.slane %v312, 4
        %v314 = vadd.f32 %v312, %v313
        %v315 = vrot.slane %v314, 2
        %v316 = vadd.f32 %v314, %v315
        %v317 = vrot.slane %v316, 1
        %v318 = vadd.f32 %v316, %v317
        %s319 = vtos %v318
        %v320 = vstv %s319
        %vm321 = vcmask 0
        %322 = vst.msk [vmem:[%s225] sm:$0x1] %vm321, %v320
        %p323 = scmp.lt.s32.totalorder %s23, 1
        %s324 = scalar_select %p323, %s23, 1
        %p325 = scmp.lt.s32.totalorder %s24, 0
        %s326 = scalar_select %p325, %s24, 0
        %s327 = sadd.s32 %s326, %s324
        %s328 = scalar_lea.vmem %s2, %s327
        // Predicated region
        $region37: #{tpu_custom_call.1} parent=27 // pred_check
          %p329 = pneg %p107
        $region38: #{tpu_custom_call.1} parent=27 // pred_check_branch
          %331 = sbr.rel (%p329) target = $region40
        $region39: #{tpu_custom_call.1} parent=27 // pred_region
          _
        $region40: #{tpu_custom_call.1} parent=27 // pred_fallthru
          _
      $region28: #{tpu_custom_call.1} parent=5 // pred_fallthru
        _
      %p332 = scmp.le.s32.totalorder 2, %s14
      // Predicated region
      $region41: #{tpu_custom_call.1} parent=5 // pred_check
        %p333 = pneg %p332
      $region42: #{tpu_custom_call.1} parent=5 // pred_check_branch
        %335 = sbr.rel (%p333) target = $region44
      $region43: #{tpu_custom_call.1} parent=5 // pred_region
        %s336 = ssub.s32 %s14, 2
        // Predicated region
        $region45: #{tpu_custom_call.1} parent=43 // pred_check
          %p337 = pneg %p113
        $region46: #{tpu_custom_call.1} parent=43 // pred_check_branch
          %339 = sbr.rel (%p337) target = $region48
        $region47: #{tpu_custom_call.1} parent=43 // pred_region
          %p340 = scmp.lt.s32.totalorder %s25, 1
          %s341 = scalar_select %p340, %s25, 1
          %p342 = scmp.lt.s32.totalorder %s26, 0
          %s343 = scalar_select %p342, %s26, 0
          %s344 = sadd.s32 %s343, %s341
          %s345 = scalar_lea.vmem %s2, %s344
        $region48: #{tpu_custom_call.1} parent=43 // pred_fallthru
          _
      $region44: #{tpu_custom_call.1} parent=5 // pred_fallthru
        _
    $region6: #{tpu_custom_call.1} parent=1 // loop_footer
      %s18 = sadd.s32 1, %s14
    $region7: #{tpu_custom_call.1} parent=1 // loop_footer_branch
      %13 = sbr.rel target = $region3
    $region8: #{tpu_custom_call.1} parent=1 // loop_exit
      _
    %346 = vsyncpa [#allocation3], 1
    %s347 = scalar_lea.sflag [#allocation3], 1
    %348 = vsyncpa %s347, 1
    %349 = vsyncpa [#allocation5], 1
    %s350 = scalar_lea.sflag [#allocation5], 1
    %351 = vsyncpa %s350, 1

</llo_original>
